<compile_context>
chip_gen: v7x
topology: tpu7x:2x2x1
jax: 0.10.0
libtpu: 0.0.40
codegen_flags: <defaults>
</compile_context>

<pallas_src>
import functools

import jax
import jax.numpy as jnp
from jax.experimental import pallas as pl
from jax.experimental.pallas import tpu as pltpu

STATE_DIM = 1
LATENT_DIM = 64
HIDDEN_DIM = 64
IN_FEATURES = STATE_DIM + LATENT_DIM + 2            # 67
BREAKDOWN_THRESHOLD = 200.0
CRITICAL_DENSITY = 1e22
DENSITY_SCALE = 1e20 / 1e-12                        # states * 1e20 / 1e-12
DENSITY_RATE = DENSITY_SCALE / CRITICAL_DENSITY     # folded constant = 1e10
CYCLES_NORM = 2000.0

TM_MAX = 2048                                       # lanes per tile (multiple of 128)


def _round_up(x, m):
    return (x + m - 1) // m * m


def _cdiv(a, b):
    return -(-a // b)


def _breakdown_kernel(b3_ref,                       # SMEM scalar [1]
                      states_ref, cycles_ref,       # (1,1,TM) seq tiles, seq on lanes
                      consts_ref,                   # (1,H,4) packed per-batch constants
                      w2t_ref, w3t_ref,             # resident bf16 weights
                      o_ref):
    """One (batch, seq-tile) step: fused MLP + physics blend, transposed layout."""
    s_row = states_ref[0]                           # [1, TM]
    c_row = cycles_ref[0]                           # [1, TM]
    consts = consts_ref[0]                          # [H, 4]
    base = consts[:, 0:1]                           # hoisted W1_lat^T@lat + f*w1_f + b1
    w1s = consts[:, 1:2]                            # W1 state column
    w1c = consts[:, 2:3]                            # W1 cycles column, pre-scaled 1/2000
    b2 = consts[:, 3:4]

    # ---- layer 1: VPU outer products (features on sublanes, seq on lanes) ----
    h1 = jnp.maximum(base + w1s * s_row + w1c * c_row, 0.0)            # [H, TM]

    # ---- layers 2 & 3 on the MXU (bf16 inputs, f32 accumulation) ----
    h2 = jnp.dot(w2t_ref[...], h1.astype(jnp.bfloat16),
                 preferred_element_type=jnp.float32) + b2
    h2 = jnp.maximum(h2, 0.0)                                          # [H, TM]
    logits = jnp.dot(w3t_ref[...], h2.astype(jnp.bfloat16),
                     preferred_element_type=jnp.float32) + b3_ref[0]   # [1, TM]
    nn_prob = jax.nn.sigmoid(logits)

    # ---- physics branch + blend + hard breakdown (all lane-dense) ----
    # TODO(synk): KineticMonteCarloPhysics.breakdown_probability source not
    # provided; using the standard percolation form 1 - exp(-n / n_crit).
    phys_prob = 1.0 - jnp.exp(-s_row * DENSITY_RATE)
    combined = 0.7 * phys_prob + 0.3 * nn_prob
    hard = (s_row >= BREAKDOWN_THRESHOLD).astype(jnp.float32)
    o_ref[0] = jnp.maximum(combined, hard)                             # [1, TM]


def init_params(key):
    """Deterministic synthetic parameters (shapes match the PyTorch module)."""
    ks = jax.random.split(key, 6)
    scale = 0.05
    w1 = scale * jax.random.normal(ks[0], (IN_FEATURES, HIDDEN_DIM), jnp.float32)
    b1 = scale * jax.random.normal(ks[1], (1, HIDDEN_DIM), jnp.float32)
    w2 = scale * jax.random.normal(ks[2], (HIDDEN_DIM, HIDDEN_DIM), jnp.float32)
    b2 = scale * jax.random.normal(ks[3], (1, HIDDEN_DIM), jnp.float32)
    w3 = scale * jax.random.normal(ks[4], (HIDDEN_DIM, 1), jnp.float32)
    b3 = scale * jax.random.normal(ks[5], (1, 1), jnp.float32)
    return (w1, b1, w2, b2, w3, b3)


@functools.partial(jax.jit, static_argnames=("tm_max",))
def breakdown_predictor(states, device_latent, electric_field, cycles, params,
                        tm_max=TM_MAX):
    """
    Args:
      states:         [B, S] or [B, S, 1] defect counts
      device_latent:  [B, LATENT_DIM]
      electric_field: [B]
      cycles:         [B, S]
    Returns:
      final_prob: [B, S] float32
    """
    states = jnp.asarray(states, jnp.float32)
    if states.ndim == 3 and states.shape[-1] == 1:
        states = jnp.squeeze(states, axis=-1)
    elif states.ndim == 1:
        states = states[None, :]
    B, S = states.shape

    device_latent = jnp.asarray(device_latent, jnp.float32).reshape(B, LATENT_DIM)
    electric_field = jnp.asarray(electric_field, jnp.float32).reshape(B)
    cycles = jnp.broadcast_to(jnp.asarray(cycles, jnp.float32), (B, S))

    w1, b1, w2, b2, w3, b3 = params
    w1 = jnp.asarray(w1, jnp.float32)

    # Hoisted per-batch layer-1 constant (O(B*H*LAT), one tiny XLA op):
    #   base[b, h] = sum_l latent[b,l]*w1[1+l,h] + field[b]*w1[65,h] + b1[h]
    base = (device_latent @ w1[1:1 + LATENT_DIM, :]
            + electric_field[:, None] * w1[1 + LATENT_DIM, :]
            + jnp.asarray(b1, jnp.float32).reshape(1, HIDDEN_DIM))       # [B, H]

    # Pack base + the skinny per-step columns into a single per-batch block.
    w1s_col = jnp.broadcast_to(w1[0, :], (B, HIDDEN_DIM))                # state col
    w1c_col = jnp.broadcast_to(w1[2 + LATENT_DIM, :] / CYCLES_NORM,      # cycles col
                               (B, HIDDEN_DIM))                          # pre-scaled
    b2_col = jnp.broadcast_to(jnp.asarray(b2, jnp.float32).reshape(HIDDEN_DIM),
                              (B, HIDDEN_DIM))
    consts = jnp.stack([base, w1s_col, w1c_col, b2_col], axis=-1)        # [B, H, 4]

    w2t = jnp.asarray(w2, jnp.float32).T.astype(jnp.bfloat16)            # [H, H]
    w3t = jnp.asarray(w3, jnp.float32).T.astype(jnp.bfloat16)            # [1, H]
    b3v = jnp.asarray(b3, jnp.float32).reshape(1)

    # Big lane tile (amortizes ~0.35us/step, multiple of 128); no HBM padding —
    # Pallas masks the out-of-bounds tail of the last sequence tile.
    s128 = _round_up(S, 128)
    TM = min(tm_max, s128)
    n_tiles = _cdiv(S, TM)
    # v7x megacore: guarantee >= 2 parallel grid steps when possible.
    if B * n_tiles < 2 and s128 >= 256:
        TM = _round_up(s128 // 2, 128)
        n_tiles = _cdiv(S, TM)
    grid = (B, n_tiles)

    states3 = states[:, None, :]                                         # (B,1,S) view
    cycles3 = cycles[:, None, :]                                         # (B,1,S) view

    seq_spec = pl.BlockSpec((1, 1, TM), lambda b, j: (b, 0, j))

    out = pl.pallas_call(
        _breakdown_kernel,
        out_shape=jax.ShapeDtypeStruct((B, 1, S), jnp.float32),
        grid=grid,
        in_specs=[
            pl.BlockSpec(memory_space=pltpu.MemorySpace.SMEM),           # b3 [1]
            seq_spec,                                                    # states
            seq_spec,                                                    # cycles
            pl.BlockSpec((1, HIDDEN_DIM, 4), lambda b, j: (b, 0, 0)),    # packed consts
            pl.BlockSpec((HIDDEN_DIM, HIDDEN_DIM), lambda b, j: (0, 0)),  # w2t (bf16)
            pl.BlockSpec((1, HIDDEN_DIM), lambda b, j: (0, 0)),          # w3t (bf16)
        ],
        out_specs=pl.BlockSpec((1, 1, TM), lambda b, j: (b, 0, j)),
        compiler_params=pltpu.CompilerParams(
            dimension_semantics=("parallel", "parallel"),
            vmem_limit_bytes=32 * 1024 * 1024),
        cost_estimate=pl.CostEstimate(
            flops=2 * B * S * (HIDDEN_DIM * HIDDEN_DIM + 2 * HIDDEN_DIM),
            transcendentals=2 * B * S,
            bytes_accessed=3 * B * S * 4),
    )(b3v, states3, cycles3, consts, w2t, w3t)

    return out[:, 0, :]


def _reference(states, device_latent, electric_field, cycles, params):
    """Pure-JAX (f32) reference mirroring the PyTorch module."""
    states = jnp.asarray(states, jnp.float32)
    if states.ndim == 3 and states.shape[-1] == 1:
        states = jnp.squeeze(states, axis=-1)
    elif states.ndim == 1:
        states = states[None, :]
    B, S = states.shape
    w1, b1, w2, b2, w3, b3 = params
    latent_exp = jnp.broadcast_to(device_latent[:, None, :], (B, S, LATENT_DIM))
    field_exp = jnp.broadcast_to(electric_field[:, None], (B, S))[..., None]
    x = jnp.concatenate([states[..., None], latent_exp, field_exp,
                         (cycles / CYCLES_NORM)[..., None]], axis=-1)
    h1 = jnp.maximum(x @ w1 + b1[0], 0.0)
    h2 = jnp.maximum(h1 @ w2 + b2[0], 0.0)
    nn_prob = jax.nn.sigmoid((h2 @ w3 + b3[0])[..., 0])
    phys = 1.0 - jnp.exp(-(states * DENSITY_SCALE) / CRITICAL_DENSITY)
    combined = 0.7 * phys + 0.3 * nn_prob
    hard = (states >= BREAKDOWN_THRESHOLD).astype(jnp.float32)
    return jnp.maximum(combined, hard)


if __name__ == "__main__":
    key = jax.random.PRNGKey(0)
    k_p, k_s, k_l, k_e, k_c, k2 = jax.random.split(key, 6)
    params = init_params(k_p)

    # --- case 1: small shapes consistent with the module (batch=2, seq=8) ---
    B, S = 2, 8
    states = jax.random.uniform(k_s, (B, S, 1), jnp.float32, 0.0, 300.0)
    device_latent = jax.random.normal(k_l, (B, LATENT_DIM), jnp.float32)
    electric_field = jax.random.uniform(k_e, (B,), jnp.float32, 0.0, 5.0)
    cycles = jax.random.uniform(k_c, (B, S), jnp.float32, 0.0, 4000.0)

    out = breakdown_predictor(states, device_latent, electric_field, cycles, params)
    out = jax.block_until_ready(out)
    ref = _reference(states, device_latent, electric_field, cycles, params)
    assert out.shape == (B, S)
    err = float(jnp.max(jnp.abs(out - ref)))
    assert err < 1e-2, f"max abs err {err}"

    # --- case 2: multi-tile grid with a partial (masked) last tile ---
    k2a, k2b, k2c, k2d, k3 = jax.random.split(k2, 5)
    B2, S2 = 2, 300
    states2 = jax.random.uniform(k2a, (B2, S2), jnp.float32, 0.0, 300.0)
    latent2 = jax.random.normal(k2b, (B2, LATENT_DIM), jnp.float32)
    field2 = jax.random.uniform(k2c, (B2,), jnp.float32, 0.0, 5.0)
    cycles2 = jax.random.uniform(k2d, (B2, S2), jnp.float32, 0.0, 4000.0)
    out2 = breakdown_predictor(states2, latent2, field2, cycles2, params, tm_max=128)
    out2 = jax.block_until_ready(out2)
    ref2 = _reference(states2, latent2, field2, cycles2, params)
    err2 = float(jnp.max(jnp.abs(out2 - ref2)))
    assert out2.shape == (B2, S2)
    assert err2 < 1e-2, f"max abs err {err2}"

    # --- case 3: B=1 exercises the >=2-tile split for v7x megacore ---
    k3a, k3b, k3c, k3d = jax.random.split(k3, 4)
    B3, S3 = 1, 600
    states3 = jax.random.uniform(k3a, (B3, S3), jnp.float32, 0.0, 300.0)
    latent3 = jax.random.normal(k3b, (B3, LATENT_DIM), jnp.float32)
    field3 = jax.random.uniform(k3c, (B3,), jnp.float32, 0.0, 5.0)
    cycles3 = jax.random.uniform(k3d, (B3, S3), jnp.float32, 0.0, 4000.0)
    out3 = breakdown_predictor(states3, latent3, field3, cycles3, params)
    out3 = jax.block_until_ready(out3)
    ref3 = _reference(states3, latent3, field3, cycles3, params)
    err3 = float(jnp.max(jnp.abs(out3 - ref3)))
    assert out3.shape == (B3, S3)
    assert err3 < 1e-2, f"max abs err {err3}"

    print("KERNEL_OK")
</pallas_src>

<mosaic_0001>
module attributes {stable_mosaic.version = 11 : i64} {
  func.func @_breakdown_kernel(%arg0: i32, %arg1: i32, %arg2: memref<1xf32, #tpu.memory_space<smem>>, %arg3: memref<1x1x128xf32, #tpu.memory_space<vmem>>, %arg4: memref<1x1x128xf32, #tpu.memory_space<vmem>>, %arg5: memref<1x64x4xf32, #tpu.memory_space<vmem>>, %arg6: memref<64x64xbf16, #tpu.memory_space<vmem>>, %arg7: memref<1x64xbf16, #tpu.memory_space<vmem>>, %arg8: memref<1x1x128xf32, #tpu.memory_space<vmem>>) attributes {dimension_semantics = [#tpu.dimension_semantics<parallel>, #tpu.dimension_semantics<parallel>], iteration_bounds = array<i64: 2, 1>, scalar_prefetch = 0 : i64, scratch_operands = 0 : i64, tpu.core_type = #tpu.core_type<tc>, window_params = [{transform_indices = @transform_0, window_bounds = array<i64: 1>}, {transform_indices = @transform_1, window_bounds = array<i64: 1, 1, 128>}, {transform_indices = @transform_2, window_bounds = array<i64: 1, 1, 128>}, {transform_indices = @transform_3, window_bounds = array<i64: 1, 64, 4>}, {pipeline_mode = #tpu.pipeline_mode<synchronous>, transform_indices = @transform_4, window_bounds = array<i64: 64, 64>}, {pipeline_mode = #tpu.pipeline_mode<synchronous>, transform_indices = @transform_5, window_bounds = array<i64: 1, 64>}, {transform_indices = @transform_6, window_bounds = array<i64: 1, 1, 128>}]} {
    %c0 = arith.constant 0 : index
    %c0_0 = arith.constant 0 : index
    %c0_1 = arith.constant 0 : index
    %0 = vector.load %arg3[%c0, %c0_0, %c0_1] : memref<1x1x128xf32, #tpu.memory_space<vmem>>, vector<1x1x128xf32>
    %1 = vector.shape_cast %0 : vector<1x1x128xf32> to vector<1x128xf32>
    %c0_2 = arith.constant 0 : index
    %c0_3 = arith.constant 0 : index
    %c0_4 = arith.constant 0 : index
    %2 = vector.load %arg4[%c0_2, %c0_3, %c0_4] : memref<1x1x128xf32, #tpu.memory_space<vmem>>, vector<1x1x128xf32>
    %3 = vector.shape_cast %2 : vector<1x1x128xf32> to vector<1x128xf32>
    %c0_5 = arith.constant 0 : index
    %c0_6 = arith.constant 0 : index
    %c0_7 = arith.constant 0 : index
    %4 = vector.load %arg5[%c0_5, %c0_6, %c0_7] : memref<1x64x4xf32, #tpu.memory_space<vmem>>, vector<1x64x4xf32>
    %5 = vector.shape_cast %4 : vector<1x64x4xf32> to vector<64x4xf32>
    %6 = vector.extract_strided_slice %5 {offsets = [0, 0], sizes = [64, 1], strides = [1, 1]} : vector<64x4xf32> to vector<64x1xf32>
    %7 = vector.extract_strided_slice %5 {offsets = [0, 1], sizes = [64, 1], strides = [1, 1]} : vector<64x4xf32> to vector<64x1xf32>
    %8 = vector.extract_strided_slice %5 {offsets = [0, 2], sizes = [64, 1], strides = [1, 1]} : vector<64x4xf32> to vector<64x1xf32>
    %9 = vector.extract_strided_slice %5 {offsets = [0, 3], sizes = [64, 1], strides = [1, 1]} : vector<64x4xf32> to vector<64x1xf32>
    %10 = vector.broadcast %7 : vector<64x1xf32> to vector<64x128xf32>
    %11 = vector.broadcast %1 : vector<1x128xf32> to vector<64x128xf32>
    %12 = arith.mulf %10, %11 : vector<64x128xf32>
    %13 = vector.broadcast %6 : vector<64x1xf32> to vector<64x128xf32>
    %14 = arith.addf %13, %12 : vector<64x128xf32>
    %15 = vector.broadcast %8 : vector<64x1xf32> to vector<64x128xf32>
    %16 = vector.broadcast %3 : vector<1x128xf32> to vector<64x128xf32>
    %17 = arith.mulf %15, %16 : vector<64x128xf32>
    %18 = arith.addf %14, %17 : vector<64x128xf32>
    %cst = arith.constant 0.000000e+00 : f32
    %19 = vector.broadcast %cst : f32 to vector<64x128xf32>
    %20 = arith.maximumf %18, %19 : vector<64x128xf32>
    %c0_8 = arith.constant 0 : index
    %c0_9 = arith.constant 0 : index
    %21 = vector.load %arg6[%c0_8, %c0_9] : memref<64x64xbf16, #tpu.memory_space<vmem>>, vector<64x64xbf16>
    %22 = arith.truncf %20 : vector<64x128xf32> to vector<64x128xbf16>
    %cst_10 = arith.constant dense<0.000000e+00> : vector<64x128xf32>
    %23 = tpu.matmul %21, %22, %cst_10 {dimension_numbers = #tpu.dot_dimension_numbers<[1], [0], [0], [1], [0, 0, 1, 1], [], []>} : vector<64x64xbf16>, vector<64x128xbf16>, vector<64x128xf32> -> vector<64x128xf32>
    %24 = vector.broadcast %9 : vector<64x1xf32> to vector<64x128xf32>
    %25 = arith.addf %23, %24 : vector<64x128xf32>
    %cst_11 = arith.constant 0.000000e+00 : f32
    %26 = vector.broadcast %cst_11 : f32 to vector<64x128xf32>
    %27 = arith.maximumf %25, %26 : vector<64x128xf32>
    %c0_12 = arith.constant 0 : index
    %c0_13 = arith.constant 0 : index
    %28 = vector.load %arg7[%c0_12, %c0_13] : memref<1x64xbf16, #tpu.memory_space<vmem>>, vector<1x64xbf16>
    %29 = arith.truncf %27 : vector<64x128xf32> to vector<64x128xbf16>
    %cst_14 = arith.constant dense<0.000000e+00> : vector<1x128xf32>
    %30 = tpu.matmul %28, %29, %cst_14 {dimension_numbers = #tpu.dot_dimension_numbers<[1], [0], [0], [1], [0, 0, 1, 1], [], []>} : vector<1x64xbf16>, vector<64x128xbf16>, vector<1x128xf32> -> vector<1x128xf32>
    %c0_15 = arith.constant 0 : index
    %31 = memref.load %arg2[%c0_15] : memref<1xf32, #tpu.memory_space<smem>>
    %32 = vector.broadcast %31 : f32 to vector<1x128xf32>
    %33 = arith.addf %30, %32 : vector<1x128xf32>
    %34 = arith.negf %33 : vector<1x128xf32>
    %35 = math.exp %34 : vector<1x128xf32>
    %cst_16 = arith.constant 1.000000e+00 : f32
    %36 = vector.broadcast %cst_16 : f32 to vector<1x128xf32>
    %37 = arith.addf %36, %35 : vector<1x128xf32>
    %38 = arith.divf %36, %37 : vector<1x128xf32>
    %cst_17 = arith.constant 0.000000e+00 : f32
    %39 = vector.broadcast %cst_17 : f32 to vector<1x128xf32>
    %40 = arith.subf %39, %1 : vector<1x128xf32>
    %cst_18 = arith.constant 1.000000e+10 : f32
    %41 = vector.broadcast %cst_18 : f32 to vector<1x128xf32>
    %42 = arith.mulf %40, %41 : vector<1x128xf32>
    %43 = math.exp %42 : vector<1x128xf32>
    %cst_19 = arith.constant 1.000000e+00 : f32
    %44 = vector.broadcast %cst_19 : f32 to vector<1x128xf32>
    %45 = arith.subf %44, %43 : vector<1x128xf32>
    %cst_20 = arith.constant 0.699999988 : f32
    %46 = vector.broadcast %cst_20 : f32 to vector<1x128xf32>
    %47 = arith.mulf %46, %45 : vector<1x128xf32>
    %cst_21 = arith.constant 3.000000e-01 : f32
    %48 = vector.broadcast %cst_21 : f32 to vector<1x128xf32>
    %49 = arith.mulf %48, %38 : vector<1x128xf32>
    %50 = arith.addf %47, %49 : vector<1x128xf32>
    %cst_22 = arith.constant 2.000000e+02 : f32
    %51 = vector.broadcast %cst_22 : f32 to vector<1x128xf32>
    %52 = arith.cmpf oge, %1, %51 : vector<1x128xf32>
    %53 = arith.extui %52 : vector<1x128xi1> to vector<1x128xi32>
    %54 = arith.sitofp %53 : vector<1x128xi32> to vector<1x128xf32>
    %55 = arith.maximumf %50, %54 : vector<1x128xf32>
    %c0_23 = arith.constant 0 : index
    %c0_24 = arith.constant 0 : index
    %c0_25 = arith.constant 0 : index
    %56 = vector.load %arg8[%c0_23, %c0_24, %c0_25] : memref<1x1x128xf32, #tpu.memory_space<vmem>>, vector<1x1x128xf32>
    %57 = vector.shape_cast %56 : vector<1x1x128xf32> to vector<1x128xf32>
    %58 = vector.shape_cast %55 : vector<1x128xf32> to vector<1x1x128xf32>
    tpu.vector_store %arg8[%c0_23, %c0_24, %c0_25], %58 {strides = array<i32>} : memref<1x1x128xf32, #tpu.memory_space<vmem>>, vector<1x1x128xf32>,
    return
  }
  func.func @transform_0(%arg0: i32, %arg1: i32) -> i32 {
    %c0_i32 = arith.constant 0 : i32
    %c0_i32_0 = arith.constant 0 : i32
    return %c0_i32 : i32
  }
  func.func @transform_1(%arg0: i32, %arg1: i32) -> (i32, i32, i32) {
    %c0_i32 = arith.constant 0 : i32
    %c0_i32_0 = arith.constant 0 : i32
    return %arg0, %c0_i32, %arg1 : i32, i32, i32
  }
  func.func @transform_2(%arg0: i32, %arg1: i32) -> (i32, i32, i32) {
    %c0_i32 = arith.constant 0 : i32
    %c0_i32_0 = arith.constant 0 : i32
    return %arg0, %c0_i32, %arg1 : i32, i32, i32
  }
  func.func @transform_3(%arg0: i32, %arg1: i32) -> (i32, i32, i32) {
    %c0_i32 = arith.constant 0 : i32
    %c0_i32_0 = arith.constant 0 : i32
    %c0_i32_1 = arith.constant 0 : i32
    return %arg0, %c0_i32, %c0_i32_0 : i32, i32, i32
  }
  func.func @transform_4(%arg0: i32, %arg1: i32) -> (i32, i32) {
    %c0_i32 = arith.constant 0 : i32
    %c0_i32_0 = arith.constant 0 : i32
    %c0_i32_1 = arith.constant 0 : i32
    return %c0_i32, %c0_i32_0 : i32, i32
  }
  func.func @transform_5(%arg0: i32, %arg1: i32) -> (i32, i32) {
    %c0_i32 = arith.constant 0 : i32
    %c0_i32_0 = arith.constant 0 : i32
    %c0_i32_1 = arith.constant 0 : i32
    return %c0_i32, %c0_i32_0 : i32, i32
  }
  func.func @transform_6(%arg0: i32, %arg1: i32) -> (i32, i32, i32) {
    %c0_i32 = arith.constant 0 : i32
    %c0_i32_0 = arith.constant 0 : i32
    return %arg0, %c0_i32, %arg1 : i32, i32, i32
  }
}

</mosaic_0001>

<llo_original>
// kernel: breakdown_predictor.1
$region0: #{breakdown_predictor.1}
  #allocation0 [shape = 'u32[]', space=smem, size = 0x4, offset = 0x4, fixed_abs, tag = 'smem constant byte address 0x4 - core index']
  #allocation1 [shape = 'u32[144,128]{1,0:T(1,128)}', space=vmem, size = 0x12000, scoped, tag = 'internal scratch']
  #allocation2 [shape = 'f32[1]{0:T(128)S(6)}', space=smem, size = 0x200, scoped, tag = 'scoped memory for breakdown_predictor.1']
  %s0 = inlined_call_operand.<no memory space> [shape: f32[1], index: 0, kind: input, shape index: {}]
  %s1 = inlined_call_operand.vmem [shape: f32[2,1,8], index: 1, kind: input, shape index: {}]
  %s2 = inlined_call_operand.vmem [shape: f32[2,1,8], index: 2, kind: input, shape index: {}]
  %s3 = inlined_call_operand.vmem [shape: f32[2,64,4], index: 3, kind: input, shape index: {}]
  %s4 = inlined_call_operand.vmem [shape: bf16[64,64], index: 4, kind: input, shape index: {}]
  %s5 = inlined_call_operand.vmem [shape: bf16[1,64], index: 5, kind: input, shape index: {}]
  %s6 = inlined_call_operand.hbm [shape: f32[2,1,8], index: 6, kind: output, shape index: {}]
  %s7 = sld [smem:[#allocation0]]
  $region57: #{breakdown_predictor.1} parent=0
    _
  %s9 = ssub.s32 1, %s7
  %s10 = scalar_select 0, %s9, %s7
  %11 = sst [smem:[#allocation2]] %s0
  $region1: #{breakdown_predictor.1} parent=0
    #allocation3 [shape = 'u8[1024]{0}', space=vmem, size = 0x400, scoped, tag = 'output window, operand 0']
    #allocation4 [shape = 's32[2]{0}', space=sflag, size = 0x8, scoped, tag = 'scoped memory for breakdown_predictor.1']
    %12 = vsyncpa [#allocation4], 0
    %s13 = scalar_lea.sflag [#allocation4], 1
    %14 = vsyncpa %s13, 0
    loop: start=0, step=1, limit=4
    $region2: #{breakdown_predictor.1} parent=1 // loop_pre_header
      _
    $region3: #{breakdown_predictor.1} parent=1 // loop_header
      %s16 = sphi 0, %s20
      %p17 = scmp.ge.s32.totalorder %s16, 4
      %s23 = sphi 0, %s35
      %s24 = sphi 0, %s31
      %s25 = sphi 0, %s23
      %s26 = sphi 0, %s24
      %s27 = sphi 0, %s25
      %s28 = sphi 0, %s26
      %s36 = sphi 0, %s36
      %s38 = sphi 0, %s36
      %s39 = sphi 0, %s38
      %s53 = sphi 0, %s39
      %s61 = sphi 0, %s63
      %s64 = sphi 0, %s61
      %s65 = sphi 0, %s64
      %s81 = sphi 0, %s65
      %s89 = sphi 0, %s91
      %s92 = sphi 0, %s89
      %s93 = sphi 0, %s92
      %s109 = sphi 0, %s93
      %s115 = sphi 0, %s117
      %s118 = sphi 0, %s115
      %s119 = sphi 0, %s118
      %s135 = sphi 0, %s119
      %s139 = sphi 0, %s139
      %s141 = sphi 0, %s139
      %s142 = sphi 0, %s141
      %s156 = sphi 0, %s142
      %s160 = sphi 0, %s160
      %s162 = sphi 0, %s160
      %s163 = sphi 0, %s162
      %s177 = sphi 0, %s163
      %s185 = sphi 0, %s187
      %s188 = sphi 0, %s185
      %s189 = sphi 0, %s188
      %s205 = sphi 0, %s189
    $region4: #{breakdown_predictor.1} parent=1 // loop_header_branch
      %19 = sbr.rel (%p17) target = $region8
    $region5: #{breakdown_predictor.1} parent=1 // loop_body
      %s21 = ssub.s32 %s16, 1
      %s22 = ssub.s32 %s16, 2
      %s29 = sadd.s32 1, %s24
      %p30 = scmp.ge.s32.totalorder %s29, 1
      %s31 = scalar_select %p30, 0, %s29
      %s32 = sadd.s32 1, %s23
      %s33 = scalar_select %p30, %s32, %s23
      %p34 = scmp.ge.s32.totalorder %s33, 2
      %s35 = scalar_select %p34, 0, %s33
      %s37 = sadd.s32 %s36, 1
      %p40 = scmp.eq.s32.totalorder %s16, 1
      %p41 = scmp.ne.s32.totalorder %s36, %s38
      %p42 = scmp.eq.s32.totalorder %s16, 0
      %p43 = por %p41, %p42
      %p44 = scmp.ne.s32.totalorder %s36, %s38
      %p45 = scmp.eq.s32.totalorder %s21, 1
      %p46 = por %p44, %p45
      %p47 = scmp.ne.s32.totalorder %s38, %s39
      %p48 = scmp.eq.s32.totalorder %s21, 0
      %p49 = por %p47, %p48
      %p50 = scmp.ne.s32.totalorder %s38, %s39
      %p51 = scmp.eq.s32.totalorder %s22, 1
      %p52 = por %p50, %p51
      %p54 = scmp.ne.s32.totalorder %s39, %s53
      %p55 = scmp.eq.s32.totalorder %s22, 0
      %p56 = por %p54, %p55
      %s57 = ssub.s32 %s23, %s35
      %s58 = ssub.s32 %s24, %s31
      %s59 = sor.u32 %s57, %s58
      %p60 = scmp.eq.s32.totalorder %s59, 0
      %s62 = sadd.s32 %s61, 1
      %s63 = scalar_select %p60, %s61, %s62
      %p66 = pneg %p60
      %p67 = scmp.eq.s32.totalorder %s16, 1
      %p68 = por %p66, %p67
      %p69 = scmp.ne.s32.totalorder %s61, %s64
      %p70 = scmp.eq.s32.totalorder %s16, 0
      %p71 = por %p69, %p70
      %p72 = scmp.ne.s32.totalorder %s61, %s64
      %p73 = scmp.eq.s32.totalorder %s21, 1
      %p74 = por %p72, %p73
      %p75 = scmp.ne.s32.totalorder %s64, %s65
      %p76 = scmp.eq.s32.totalorder %s21, 0
      %p77 = por %p75, %p76
      %p78 = scmp.ne.s32.totalorder %s64, %s65
      %p79 = scmp.eq.s32.totalorder %s22, 1
      %p80 = por %p78, %p79
      %p82 = scmp.ne.s32.totalorder %s65, %s81
      %p83 = scmp.eq.s32.totalorder %s22, 0
      %p84 = por %p82, %p83
      %s85 = ssub.s32 %s23, %s35
      %s86 = ssub.s32 %s24, %s31
      %s87 = sor.u32 %s85, %s86
      %p88 = scmp.eq.s32.totalorder %s87, 0
      %s90 = sadd.s32 %s89, 1
      %s91 = scalar_select %p88, %s89, %s90
      %p94 = pneg %p88
      %p95 = scmp.eq.s32.totalorder %s16, 1
      %p96 = por %p94, %p95
      %p97 = scmp.ne.s32.totalorder %s89, %s92
      %p98 = scmp.eq.s32.totalorder %s16, 0
      %p99 = por %p97, %p98
      %p100 = scmp.ne.s32.totalorder %s89, %s92
      %p101 = scmp.eq.s32.totalorder %s21, 1
      %p102 = por %p100, %p101
      %p103 = scmp.ne.s32.totalorder %s92, %s93
      %p104 = scmp.eq.s32.totalorder %s21, 0
      %p105 = por %p103, %p104
      %p106 = scmp.ne.s32.totalorder %s92, %s93
      %p107 = scmp.eq.s32.totalorder %s22, 1
      %p108 = por %p106, %p107
      %p110 = scmp.ne.s32.totalorder %s93, %s109
      %p111 = scmp.eq.s32.totalorder %s22, 0
      %p112 = por %p110, %p111
      %s113 = ssub.s32 %s23, %s35
      %p114 = scmp.eq.s32.totalorder %s113, 0
      %s116 = sadd.s32 %s115, 1
      %s117 = scalar_select %p114, %s115, %s116
      %p120 = pneg %p114
      %p121 = scmp.eq.s32.totalorder %s16, 1
      %p122 = por %p120, %p121
      %p123 = scmp.ne.s32.totalorder %s115, %s118
      %p124 = scmp.eq.s32.totalorder %s16, 0
      %p125 = por %p123, %p124
      %p126 = scmp.ne.s32.totalorder %s115, %s118
      %p127 = scmp.eq.s32.totalorder %s21, 1
      %p128 = por %p126, %p127
      %p129 = scmp.ne.s32.totalorder %s118, %s119
      %p130 = scmp.eq.s32.totalorder %s21, 0
      %p131 = por %p129, %p130
      %p132 = scmp.ne.s32.totalorder %s118, %s119
      %p133 = scmp.eq.s32.totalorder %s22, 1
      %p134 = por %p132, %p133
      %p136 = scmp.ne.s32.totalorder %s119, %s135
      %p137 = scmp.eq.s32.totalorder %s22, 0
      %p138 = por %p136, %p137
      %s140 = sadd.s32 %s139, 1
      %p143 = scmp.eq.s32.totalorder %s16, 1
      %p144 = scmp.ne.s32.totalorder %s139, %s141
      %p145 = scmp.eq.s32.totalorder %s16, 0
      %p146 = por %p144, %p145
      %p147 = scmp.ne.s32.totalorder %s139, %s141
      %p148 = scmp.eq.s32.totalorder %s21, 1
      %p149 = por %p147, %p148
      %p150 = scmp.ne.s32.totalorder %s141, %s142
      %p151 = scmp.eq.s32.totalorder %s21, 0
      %p152 = por %p150, %p151
      %p153 = scmp.ne.s32.totalorder %s141, %s142
      %p154 = scmp.eq.s32.totalorder %s22, 1
      %p155 = por %p153, %p154
      %p157 = scmp.ne.s32.totalorder %s142, %s156
      %p158 = scmp.eq.s32.totalorder %s22, 0
      %p159 = por %p157, %p158
      %s161 = sadd.s32 %s160, 1
      %p164 = scmp.eq.s32.totalorder %s16, 1
      %p165 = scmp.ne.s32.totalorder %s160, %s162
      %p166 = scmp.eq.s32.totalorder %s16, 0
      %p167 = por %p165, %p166
      %p168 = scmp.ne.s32.totalorder %s160, %s162
      %p169 = scmp.eq.s32.totalorder %s21, 1
      %p170 = por %p168, %p169
      %p171 = scmp.ne.s32.totalorder %s162, %s163
      %p172 = scmp.eq.s32.totalorder %s21, 0
      %p173 = por %p171, %p172
      %p174 = scmp.ne.s32.totalorder %s162, %s163
      %p175 = scmp.eq.s32.totalorder %s22, 1
      %p176 = por %p174, %p175
      %p178 = scmp.ne.s32.totalorder %s163, %s177
      %p179 = scmp.eq.s32.totalorder %s22, 0
      %p180 = por %p178, %p179
      %s181 = ssub.s32 %s23, %s35
      %s182 = ssub.s32 %s24, %s31
      %s183 = sor.u32 %s181, %s182
      %p184 = scmp.eq.s32.totalorder %s183, 0
      %s186 = sadd.s32 %s185, 1
      %s187 = scalar_select %p184, %s185, %s186
      %p190 = pneg %p184
      %p191 = scmp.eq.s32.totalorder %s16, 1
      %p192 = por %p190, %p191
      %p193 = scmp.ne.s32.totalorder %s185, %s188
      %p194 = scmp.eq.s32.totalorder %s16, 0
      %p195 = por %p193, %p194
      %p196 = scmp.ne.s32.totalorder %s185, %s188
      %p197 = scmp.eq.s32.totalorder %s21, 1
      %p198 = por %p196, %p197
      %p199 = scmp.ne.s32.totalorder %s188, %s189
      %p200 = scmp.eq.s32.totalorder %s21, 0
      %p201 = por %p199, %p200
      %p202 = scmp.ne.s32.totalorder %s188, %s189
      %p203 = scmp.eq.s32.totalorder %s22, 1
      %p204 = por %p202, %p203
      %p206 = scmp.ne.s32.totalorder %s189, %s205
      %p207 = scmp.eq.s32.totalorder %s22, 0
      %p208 = por %p206, %p207
      %p209 = scmp.le.s32.totalorder 1, %s16
      %p210 = scmp.lt.s32.totalorder %s16, 3
      %p211 = pnand %p209, %p210
      %p212 = pneg %p211
      // Predicated region
      $region9: #{breakdown_predictor.1} parent=5 // pred_check
        _
      $region10: #{breakdown_predictor.1} parent=5 // pred_check_branch
        %214 = sbr.rel (%p211) target = $region12
      $region11: #{breakdown_predictor.1} parent=5 // pred_region
        %s215 = ssub.s32 %s16, 1
        // Predicated region
        $region13: #{breakdown_predictor.1} parent=11 // pred_check
          %p216 = pneg %p49
        $region14: #{breakdown_predictor.1} parent=11 // pred_check_branch
          %218 = sbr.rel (%p216) target = $region16
        $region15: #{breakdown_predictor.1} parent=11 // pred_region
          _
        $region16: #{breakdown_predictor.1} parent=11 // pred_fallthru
          _
        // Predicated region
        $region17: #{breakdown_predictor.1} parent=11 // pred_check
          %p219 = pneg %p152
        $region18: #{breakdown_predictor.1} parent=11 // pred_check_branch
          %221 = sbr.rel (%p219) target = $region20
        $region19: #{breakdown_predictor.1} parent=11 // pred_region
          _
        $region20: #{breakdown_predictor.1} parent=11 // pred_fallthru
          _
        // Predicated region
        $region21: #{breakdown_predictor.1} parent=11 // pred_check
          %p222 = pneg %p173
        $region22: #{breakdown_predictor.1} parent=11 // pred_check_branch
          %224 = sbr.rel (%p222) target = $region24
        $region23: #{breakdown_predictor.1} parent=11 // pred_region
          _
        $region24: #{breakdown_predictor.1} parent=11 // pred_fallthru
          _
      $region12: #{breakdown_predictor.1} parent=5 // pred_fallthru
        _
      %p225 = scmp.lt.s32.totalorder %s16, 2
      // Predicated region
      $region25: #{breakdown_predictor.1} parent=5 // pred_check
        %p226 = pneg %p225
      $region26: #{breakdown_predictor.1} parent=5 // pred_check_branch
        %228 = sbr.rel (%p226) target = $region28
      $region27: #{breakdown_predictor.1} parent=5 // pred_region
        // Predicated region
        $region29: #{breakdown_predictor.1} parent=27 // pred_check
          %p229 = pneg %p71
        $region30: #{breakdown_predictor.1} parent=27 // pred_check_branch
          %231 = sbr.rel (%p229) target = $region32
        $region31: #{breakdown_predictor.1} parent=27 // pred_region
          %p232 = scmp.lt.s32.totalorder %s23, 1
          %s233 = scalar_select %p232, %s23, 1
          %p234 = scmp.lt.s32.totalorder %s24, 0
          %s235 = scalar_select %p234, %s24, 0
          %s236 = sadd.s32 %s235, %s233
          %s237 = scalar_lea.vmem %s1, %s236
        $region32: #{breakdown_predictor.1} parent=27 // pred_fallthru
          _
        // Predicated region
        $region33: #{breakdown_predictor.1} parent=27 // pred_check
          %p238 = pneg %p99
        $region34: #{breakdown_predictor.1} parent=27 // pred_check_branch
          %240 = sbr.rel (%p238) target = $region36
        $region35: #{breakdown_predictor.1} parent=27 // pred_region
          %p241 = scmp.lt.s32.totalorder %s23, 1
          %s242 = scalar_select %p241, %s23, 1
          %p243 = scmp.lt.s32.totalorder %s24, 0
          %s244 = scalar_select %p243, %s24, 0
          %s245 = sadd.s32 %s244, %s242
          %s246 = scalar_lea.vmem %s2, %s245
        $region36: #{breakdown_predictor.1} parent=27 // pred_fallthru
          _
        // Predicated region
        $region37: #{breakdown_predictor.1} parent=27 // pred_check
          %p247 = pneg %p125
        $region38: #{breakdown_predictor.1} parent=27 // pred_check_branch
          %249 = sbr.rel (%p247) target = $region40
        $region39: #{breakdown_predictor.1} parent=27 // pred_region
          %p250 = scmp.lt.s32.totalorder %s23, 1
          %s251 = scalar_select %p250, %s23, 1
          %s252 = smul.addr %s251, 8
          %s253 = smul.addr %s252, 8
          %s254 = scalar_lea.vmem %s3, %s253
        $region40: #{breakdown_predictor.1} parent=27 // pred_fallthru
          _
      $region28: #{breakdown_predictor.1} parent=5 // pred_fallthru
        _
      %p255 = scmp.le.s32.totalorder 1, %s16
      %p256 = scmp.lt.s32.totalorder %s16, 3
      %p257 = pnand %p255, %p256
      %p258 = pneg %p257
      // Predicated region
      $region41: #{breakdown_predictor.1} parent=5 // pred_check
        _
      $region42: #{breakdown_predictor.1} parent=5 // pred_check_branch
        %260 = sbr.rel (%p257) target = $region44
      $region43: #{breakdown_predictor.1} parent=5 // pred_region
        %s261 = ssub.s32 %s16, 1
        %p262 = pneg %p49
        %p263 = pneg %p46
        %p264 = scmp.lt.s32.totalorder %s25, 1
        %s265 = scalar_select %p264, %s25, 1
        %p266 = scmp.lt.s32.totalorder %s26, 0
        %s267 = scalar_select %p266, %s26, 0
        %s268 = sadd.s32 %s267, %s265
        %s269 = scalar_lea.vmem %s1, %s268
        %p270 = pneg %p77
        %p271 = pneg %p74
        %p272 = scmp.lt.s32.totalorder %s25, 1
        %s273 = scalar_select %p272, %s25, 1
        %p274 = scmp.lt.s32.totalorder %s26, 0
        %s275 = scalar_select %p274, %s26, 0
        %s276 = sadd.s32 %s275, %s273
        %s277 = scalar_lea.vmem %s2, %s276
        %p278 = pneg %p105
        %p279 = pneg %p102
        %p280 = scmp.lt.s32.totalorder %s25, 1
        %s281 = scalar_select %p280, %s25, 1
        %s282 = smul.addr %s281, 8
        %s283 = smul.addr %s282, 8
        %s284 = scalar_lea.vmem %s3, %s283
        %p285 = pneg %p131
        %p286 = pneg %p128
        %p287 = pneg %p152
        %p288 = pneg %p149
        %p289 = pneg %p173
        %p290 = pneg %p170
        %p291 = pneg %p201
        %p292 = pneg %p198
        %s293 = sand.u32 %s188, 1
        %s294 = scalar_lea.sflag [#allocation4], %s293
        %s295 = sand.u32 %s188, 1
        %s296 = scalar_lea.vmem [#allocation3], %s295
        %p297 = scmp.lt.s32.totalorder %s25, 1
        %s298 = scalar_select %p297, %s25, 1
        %p299 = scmp.lt.s32.totalorder %s26, 0
        %s300 = scalar_select %p299, %s26, 0
        %s301 = sadd.s32 %s300, %s298
        %s302 = scalar_lea.vmem %s1, %s301
        %p303 = scmp.lt.s32.totalorder %s25, 1
        %s304 = scalar_select %p303, %s25, 1
        %p305 = scmp.lt.s32.totalorder %s26, 0
        %s306 = scalar_select %p305, %s26, 0
        %s307 = sadd.s32 %s306, %s304
        %s308 = scalar_lea.vmem %s2, %s307
        %p309 = scmp.lt.s32.totalorder %s25, 1
        %s310 = scalar_select %p309, %s25, 1
        %s311 = smul.addr %s310, 8
        %s312 = smul.addr %s311, 8
        %s313 = scalar_lea.vmem %s3, %s312
        %v315 = vld [vmem:[%s302] sm:$0x1]
        %v316 = vld [vmem:[%s308] sm:$0x1]
        %v317 = vld [vmem:[%s313] sm:$0xff]
        %v318 = vld [vmem:[%s313 + $0x8] sm:$0xff]
        %v319 = vld [vmem:[%s313 + $0x10] sm:$0xff]
        %v320 = vld [vmem:[%s313 + $0x18] sm:$0xff]
        %v321 = vld [vmem:[%s313 + $0x20] sm:$0xff]
        %v322 = vld [vmem:[%s313 + $0x28] sm:$0xff]
        %v323 = vld [vmem:[%s313 + $0x30] sm:$0xff]
        %v324 = vld [vmem:[%s313 + $0x38] sm:$0xff]
        %326 = vset.pattern.permute.xlu0 1
        %327 = vperm.xlu0 %326, %v317
        %v328 = vpop.permute.xlu0 %327
        %331 = vset.pattern.permute.xlu0 1
        %332 = vperm.xlu0 %331, %v318
        %v333 = vpop.permute.xlu0 %332
        %336 = vset.pattern.permute.xlu0 1
        %337 = vperm.xlu0 %336, %v319
        %v338 = vpop.permute.xlu0 %337
        %341 = vset.pattern.permute.xlu0 1
        %342 = vperm.xlu0 %341, %v320
        %v343 = vpop.permute.xlu0 %342
        %346 = vset.pattern.permute.xlu0 1
        %347 = vperm.xlu0 %346, %v321
        %v348 = vpop.permute.xlu0 %347
        %351 = vset.pattern.permute.xlu0 1
        %352 = vperm.xlu0 %351, %v322
        %v353 = vpop.permute.xlu0 %352
        %356 = vset.pattern.permute.xlu0 1
        %357 = vperm.xlu0 %356, %v323
        %v358 = vpop.permute.xlu0 %357
        %361 = vset.pattern.permute.xlu0 1
        %362 = vperm.xlu0 %361, %v324
        %v363 = vpop.permute.xlu0 %362
        %v366 = vlaneseq
        %v367 = vshrl.u32 %v366, 7
        %v368 = vsub.s32 0, %v367
        %v369 = vrot.slane %v315, %v368
        %v371 = vmul.f32 %v328, %v369
        %v372 = vmul.f32 %v333, %v369
        %v373 = vmul.f32 %v338, %v369
        %v374 = vmul.f32 %v343, %v369
        %v375 = vmul.f32 %v348, %v369
        %v376 = vmul.f32 %v353, %v369
        %v377 = vmul.f32 %v358, %v369
        %v378 = vmul.f32 %v363, %v369
        %379 = vset.pattern.permute.xlu0 0
        %380 = vperm.xlu0 %379, %v317
        %v381 = vpop.permute.xlu0 %380
        %383 = vset.pattern.permute.xlu0 0
        %384 = vperm.xlu0 %383, %v318
        %v385 = vpop.permute.xlu0 %384
        %387 = vset.pattern.permute.xlu0 0
        %388 = vperm.xlu0 %387, %v319
        %v389 = vpop.permute.xlu0 %388
        %391 = vset.pattern.permute.xlu0 0
        %392 = vperm.xlu0 %391, %v320
        %v393 = vpop.permute.xlu0 %392
        %395 = vset.pattern.permute.xlu0 0
        %396 = vperm.xlu0 %395, %v321
        %v397 = vpop.permute.xlu0 %396
        %399 = vset.pattern.permute.xlu0 0
        %400 = vperm.xlu0 %399, %v322
        %v401 = vpop.permute.xlu0 %400
        %403 = vset.pattern.permute.xlu0 0
        %404 = vperm.xlu0 %403, %v323
        %v405 = vpop.permute.xlu0 %404
        %407 = vset.pattern.permute.xlu0 0
        %408 = vperm.xlu0 %407, %v324
        %v409 = vpop.permute.xlu0 %408
        %v411 = vadd.f32 %v381, %v371
        %v412 = vadd.f32 %v385, %v372
        %v413 = vadd.f32 %v389, %v373
        %v414 = vadd.f32 %v393, %v374
        %v415 = vadd.f32 %v397, %v375
        %v416 = vadd.f32 %v401, %v376
        %v417 = vadd.f32 %v405, %v377
        %v418 = vadd.f32 %v409, %v378
        %419 = vset.pattern.permute.xlu0 2
        %420 = vperm.xlu0 %419, %v317
        %v421 = vpop.permute.xlu0 %420
        %423 = vset.pattern.permute.xlu0 2
        %424 = vperm.xlu0 %423, %v318
        %v425 = vpop.permute.xlu0 %424
        %427 = vset.pattern.permute.xlu0 2
        %428 = vperm.xlu0 %427, %v319
        %v429 = vpop.permute.xlu0 %428
        %431 = vset.pattern.permute.xlu0 2
        %432 = vperm.xlu0 %431, %v320
        %v433 = vpop.permute.xlu0 %432
        %435 = vset.pattern.permute.xlu0 2
        %436 = vperm.xlu0 %435, %v321
        %v437 = vpop.permute.xlu0 %436
        %439 = vset.pattern.permute.xlu0 2
        %440 = vperm.xlu0 %439, %v322
        %v441 = vpop.permute.xlu0 %440
        %443 = vset.pattern.permute.xlu0 2
        %444 = vperm.xlu0 %443, %v323
        %v445 = vpop.permute.xlu0 %444
        %447 = vset.pattern.permute.xlu0 2
        %448 = vperm.xlu0 %447, %v324
        %v449 = vpop.permute.xlu0 %448
        %v452 = vlaneseq
        %v453 = vshrl.u32 %v452, 7
        %v454 = vsub.s32 0, %v453
        %v455 = vrot.slane %v316, %v454
        %v457 = vmul.f32 %v421, %v455
        %v458 = vmul.f32 %v425, %v455
        %v459 = vmul.f32 %v429, %v455
        %v460 = vmul.f32 %v433, %v455
        %v461 = vmul.f32 %v437, %v455
        %v462 = vmul.f32 %v441, %v455
        %v463 = vmul.f32 %v445, %v455
        %v464 = vmul.f32 %v449, %v455
        %v465 = vadd.f32 %v411, %v457
        %v466 = vadd.f32 %v412, %v458
        %v467 = vadd.f32 %v413, %v459
        %v468 = vadd.f32 %v414, %v460
        %v469 = vadd.f32 %v415, %v461
        %v470 = vadd.f32 %v416, %v462
        %v471 = vadd.f32 %v417, %v463
        %v472 = vadd.f32 %v418, %v464
        %v473 = vmax.f32 %v465, 0.0
        %v474 = vmax.f32 %v466, 0.0
        %v475 = vmax.f32 %v467, 0.0
        %v476 = vmax.f32 %v468, 0.0
        %v477 = vmax.f32 %v469, 0.0
        %v478 = vmax.f32 %v470, 0.0
        %v479 = vmax.f32 %v471, 0.0
        %v480 = vmax.f32 %v472, 0.0
        %v481 = vld [vmem:[%s4] sm:$0xf]
        %v482 = vld [vmem:[%s4 + $0x4] sm:$0xf]
        %v483 = vld [vmem:[%s4 + $0x8] sm:$0xf]
        %v484 = vld [vmem:[%s4 + $0xc] sm:$0xf]
        %v485 = vld [vmem:[%s4 + $0x10] sm:$0xf]
        %v486 = vld [vmem:[%s4 + $0x14] sm:$0xf]
        %v487 = vld [vmem:[%s4 + $0x18] sm:$0xf]
        %v488 = vld [vmem:[%s4 + $0x1c] sm:$0xf]
        %v489 = vpack.c.bf16 %v474, %v473
        %v490 = vpack.c.bf16 %v476, %v475
        %v491 = vpack.c.bf16 %v478, %v477
        %v492 = vpack.c.bf16 %v480, %v479
        %493 = vset.pattern.permute.xlu0 3
        %494 = vperm.xlu0 %493, %v317
        %v495 = vpop.permute.xlu0 %494
        %497 = vset.pattern.permute.xlu0 3
        %498 = vperm.xlu0 %497, %v318
        %v499 = vpop.permute.xlu0 %498
        %501 = vset.pattern.permute.xlu0 3
        %502 = vperm.xlu0 %501, %v319
        %v503 = vpop.permute.xlu0 %502
        %505 = vset.pattern.permute.xlu0 3
        %506 = vperm.xlu0 %505, %v320
        %v507 = vpop.permute.xlu0 %506
        %509 = vset.pattern.permute.xlu0 3
        %510 = vperm.xlu0 %509, %v321
        %v511 = vpop.permute.xlu0 %510
        %513 = vset.pattern.permute.xlu0 3
        %514 = vperm.xlu0 %513, %v322
        %v515 = vpop.permute.xlu0 %514
        %517 = vset.pattern.permute.xlu0 3
        %518 = vperm.xlu0 %517, %v323
        %v519 = vpop.permute.xlu0 %518
        %521 = vset.pattern.permute.xlu0 3
        %522 = vperm.xlu0 %521, %v324
        %v523 = vpop.permute.xlu0 %522
        %v533 = vunpack.c.l.b16 %v481
        %v534 = vunpack.c.l.b16 %v482
        %v535 = vunpack.c.l.b16 %v483
        %v536 = vunpack.c.l.b16 %v484
        %v537 = vunpack.c.l.b16 %v485
        %v538 = vunpack.c.l.b16 %v486
        %v539 = vunpack.c.l.b16 %v487
        %v540 = vunpack.c.l.b16 %v488
        %v541 = vpack.c.b16 %v534, %v533
        %v542 = vpack.c.b16 %v536, %v535
        %v543 = vpack.c.b16 %v538, %v537
        %v544 = vpack.c.b16 %v540, %v539
        %vm545 = vcmask 523264
        %v547 = vsel %vm545, %v541, 0
        %v550 = vsel %vm545, %v542, 0
        %v553 = vsel %vm545, %v543, 0
        %v556 = vsel %vm545, %v544, 0
        %558 = vmatprep.subr.bf16.mxu0 0
        %559 = vmatpush1.bf16.msra.mxu0 %v489
        %560 = vmatprep.subr.bf16.mxu0 0
        %561 = vmatpush1.bf16.msra.mxu0 %v490
        %562 = vmatprep.subr.bf16.mxu0 0
        %563 = vmatpush1.bf16.msra.mxu0 %v491
        %564 = vmatprep.subr.bf16.mxu0 0
        %565 = vmatpush1.bf16.msra.mxu0 %v492
        %566 = vmatprep.subr.bf16.mxu0 0
        %567 = vmatpush1.bf16.msra.mxu0 0
        %568 = vmatprep.subr.bf16.mxu0 0
        %569 = vmatpush1.bf16.msra.mxu0 0
        %570 = vmatprep.subr.bf16.mxu0 0
        %571 = vmatpush1.bf16.msra.mxu0 0
        %572 = vmatprep.subr.bf16.mxu0 0
        %573 = vmatpush1.bf16.msra.mxu0 0
        %574 = vmatprep.subr.bf16.mxu0 0
        %575 = vmatpush1.bf16.msra.mxu0 0
        %576 = vmatprep.subr.bf16.mxu0 0
        %577 = vmatpush1.bf16.msra.mxu0 0
        %578 = vmatprep.subr.bf16.mxu0 0
        %579 = vmatpush1.bf16.msra.mxu0 0
        %580 = vmatprep.subr.bf16.mxu0 0
        %581 = vmatpush1.bf16.msra.mxu0 0
        %582 = vmatprep.subr.bf16.mxu0 0
        %583 = vmatpush1.bf16.msra.mxu0 0
        %584 = vmatprep.subr.bf16.mxu0 0
        %585 = vmatpush1.bf16.msra.mxu0 0
        %586 = vmatprep.subr.bf16.mxu0 0
        %587 = vmatpush1.bf16.msra.mxu0 0
        %588 = vmatprep.subr.bf16.mxu0 0
        %589 = vmatpush1.bf16.msra.mxu0 0
        %590 = vmatprep.mubr.bf16.mxu0 0
        %591 = vmatmul.mubr.bf16.gmra.mrb[0].mxu0 %v547
        %v592 = vpop.f32.mrb[0].mxu0
        %v593 = vadd.f32 %v495, %v592
        %v594 = vpop.f32.mrb[0].mxu0
        %v595 = vpop.f32.mrb[0].mxu0
        %v596 = vadd.f32 %v499, %v595
        %v597 = vpop.f32.mrb[0].mxu0
        %598 = vmatprep.mubr.bf16.mxu0 0
        %599 = vmatmul.mubr.bf16.gmra.mrb[0].mxu0 %v550
        %v600 = vpop.f32.mrb[0].mxu0
        %v601 = vadd.f32 %v503, %v600
        %v602 = vpop.f32.mrb[0].mxu0
        %v603 = vpop.f32.mrb[0].mxu0
        %v604 = vadd.f32 %v507, %v603
        %v605 = vpop.f32.mrb[0].mxu0
        %606 = vmatprep.mubr.bf16.mxu0 0
        %607 = vmatmul.mubr.bf16.gmra.mrb[0].mxu0 %v553
        %v608 = vpop.f32.mrb[0].mxu0
        %v609 = vadd.f32 %v511, %v608
        %v610 = vpop.f32.mrb[0].mxu0
        %v611 = vpop.f32.mrb[0].mxu0
        %v612 = vadd.f32 %v515, %v611
        %v613 = vpop.f32.mrb[0].mxu0
        %614 = vmatprep.mubr.bf16.mxu0 0
        %615 = vmatmul.mubr.bf16.gmra.mrb[0].mxu0 %v556
        %v616 = vpop.f32.mrb[0].mxu0
        %v617 = vadd.f32 %v519, %v616
        %v618 = vpop.f32.mrb[0].mxu0
        %v619 = vpop.f32.mrb[0].mxu0
        %v620 = vadd.f32 %v523, %v619
        %v621 = vpop.f32.mrb[0].mxu0
        %622 = vdwg.mxu0
        %v623 = vmax.f32 %v593, 0.0
        %v624 = vmax.f32 %v596, 0.0
        %v625 = vmax.f32 %v601, 0.0
        %v626 = vmax.f32 %v604, 0.0
        %v627 = vmax.f32 %v609, 0.0
        %v628 = vmax.f32 %v612, 0.0
        %v629 = vmax.f32 %v617, 0.0
        %v630 = vmax.f32 %v620, 0.0
        %v631 = vld [vmem:[%s5] sm:$0x1]
        %v632 = vpack.c.bf16 %v624, %v623
        %v633 = vpack.c.bf16 %v626, %v625
        %v634 = vpack.c.bf16 %v628, %v627
        %v635 = vpack.c.bf16 %v630, %v629
        %s636 = sld [smem:[#allocation2]]
        %v637 = vstv %s636
        %v639 = vsel %vm545, %v631, 0
        %641 = vmatprep.subr.bf16.mxu0 0
        %642 = vmatpush1.bf16.msra.mxu0 %v632
        %643 = vmatprep.subr.bf16.mxu0 0
        %644 = vmatpush1.bf16.msra.mxu0 %v633
        %645 = vmatprep.subr.bf16.mxu0 0
        %646 = vmatpush1.bf16.msra.mxu0 %v634
        %647 = vmatprep.subr.bf16.mxu0 0
        %648 = vmatpush1.bf16.msra.mxu0 %v635
        %649 = vmatprep.subr.bf16.mxu0 0
        %650 = vmatpush1.bf16.msra.mxu0 0
        %651 = vmatprep.subr.bf16.mxu0 0
        %652 = vmatpush1.bf16.msra.mxu0 0
        %653 = vmatprep.subr.bf16.mxu0 0
        %654 = vmatpush1.bf16.msra.mxu0 0
        %655 = vmatprep.subr.bf16.mxu0 0
        %656 = vmatpush1.bf16.msra.mxu0 0
        %657 = vmatprep.subr.bf16.mxu0 0
        %658 = vmatpush1.bf16.msra.mxu0 0
        %659 = vmatprep.subr.bf16.mxu0 0
        %660 = vmatpush1.bf16.msra.mxu0 0
        %661 = vmatprep.subr.bf16.mxu0 0
        %662 = vmatpush1.bf16.msra.mxu0 0
        %663 = vmatprep.subr.bf16.mxu0 0
        %664 = vmatpush1.bf16.msra.mxu0 0
        %665 = vmatprep.subr.bf16.mxu0 0
        %666 = vmatpush1.bf16.msra.mxu0 0
        %667 = vmatprep.subr.bf16.mxu0 0
        %668 = vmatpush1.bf16.msra.mxu0 0
        %669 = vmatprep.subr.bf16.mxu0 0
        %670 = vmatpush1.bf16.msra.mxu0 0
        %671 = vmatprep.subr.bf16.mxu0 0
        %672 = vmatpush1.bf16.msra.mxu0 0
        %673 = vmatprep.mubr.bf16.mxu0 0
        %674 = vmatmul.mubr.bf16.gmra.mrb[0].mxu0 %v639
        %v675 = vpop.f32.mrb[0].mxu0
        %v676 = vadd.f32 %v637, %v675
        %v677 = vpop.f32.mrb[0].mxu0
        %v678 = vpop.f32.mrb[0].mxu0
        %v679 = vpop.f32.mrb[0].mxu0
        %680 = vdwg.mxu0
        %v681 = vxor.u32 %v676, 2147483648
        %v682 = vmul.f32 %v681, 1.442695
        %v683 = vpow.pop %v682
        %v684 = vadd.f32 %v683, 1.0
        %v685 = vrcp.pop %v684
        %v686 = vmul.f32 1.0, %v685
        %v687 = vsub.f32 0.0, %v315
        %v688 = vmul.f32 %v687, 1e+10
        %v689 = vmul.f32 %v688, 1.442695
        %v690 = vpow.pop %v689
        %v691 = vsub.f32 1.0, %v690
        %v692 = vmul.f32 %v691, 0.7
        %v693 = vmul.f32 %v686, 0.3
        %v694 = vadd.f32 %v692, %v693
        %vm695 = vcmp.ge.f32.partialorder %v315, 200.0
        %v696 = vsel %vm695, 1, 0
        %v697 = vcvt.s32.f32 %v696
        %v698 = vmax.f32 %v694, %v697
        %699 = vst [vmem:[%s296] sm:$0x1] %v698
        %s700 = sand.u32 %s188, 1
        %s701 = scalar_lea.sflag [#allocation4], %s700
        %s702 = sand.u32 %s188, 1
        %s703 = scalar_lea.vmem [#allocation3], %s702
        // Predicated region
        $region45: #{breakdown_predictor.1} parent=43 // pred_check
          %p704 = pneg %p198
        $region46: #{breakdown_predictor.1} parent=43 // pred_check_branch
          %706 = sbr.rel (%p704) target = $region48
        $region47: #{breakdown_predictor.1} parent=43 // pred_region
          %s708 = ssub.s32 16, 16
          %709 = vsyncadd %s701, %s708
          %s710 = sadd.s32 %s26, %s25
          %s711 = smul.addr %s710, 16
          %s712 = scalar_lea.hbm %s6, %s711
          %s714 = sshll.u32 %s703, 4
          %s715 = int_to_ptr.vmem [resolvable:$true] %s714
          %717 = dma.vmem_to_hbm [thread:$0]  %s715, 16, %s712, %s701
        $region48: #{breakdown_predictor.1} parent=43 // pred_fallthru
          _
      $region44: #{breakdown_predictor.1} parent=5 // pred_fallthru
        _
      %p718 = scmp.le.s32.totalorder 2, %s16
      // Predicated region
      $region49: #{breakdown_predictor.1} parent=5 // pred_check
        %p719 = pneg %p718
      $region50: #{breakdown_predictor.1} parent=5 // pred_check_branch
        %721 = sbr.rel (%p719) target = $region52
      $region51: #{breakdown_predictor.1} parent=5 // pred_region
        %s722 = ssub.s32 %s16, 2
        // Predicated region
        $region53: #{breakdown_predictor.1} parent=51 // pred_check
          %p723 = pneg %p204
        $region54: #{breakdown_predictor.1} parent=51 // pred_check_branch
          %725 = sbr.rel (%p723) target = $region56
        $region55: #{breakdown_predictor.1} parent=51 // pred_region
          %s726 = sand.u32 %s189, 1
          %s727 = scalar_lea.sflag [#allocation4], %s726
          %s728 = sand.u32 %s189, 1
          %s729 = scalar_lea.vmem [#allocation3], %s728
          %730 = dma.done %s727, 16
        $region56: #{breakdown_predictor.1} parent=51 // pred_fallthru
          _
      $region52: #{breakdown_predictor.1} parent=5 // pred_fallthru
        _
    $region6: #{breakdown_predictor.1} parent=1 // loop_footer
      %s20 = sadd.s32 1, %s16
    $region7: #{breakdown_predictor.1} parent=1 // loop_footer_branch
      %15 = sbr.rel target = $region3
    $region8: #{breakdown_predictor.1} parent=1 // loop_exit
      _
    %731 = vsyncpa [#allocation4], 1
    %s732 = scalar_lea.sflag [#allocation4], 1
    %733 = vsyncpa %s732, 1

</llo_original>
